<compile_context>
chip_gen: v7x
topology: tpu7x:2x2x1
jax: 0.10.0
libtpu: 0.0.40
codegen_flags: <defaults>
</compile_context>

<pallas_src>
import functools

import jax
import jax.numpy as jnp
from jax.experimental import pallas as pl
from jax.experimental.pallas import tpu as pltpu


def _fake_quant_kernel(x_ref, bf_ref, o_ref, *, group_size, num_groups,
                       e_bits, emin, emax, smin, smax):
    """One tile: x_ref/o_ref are (TR, in_features) in native dtype,
    bf_ref is (TR, num_groups) float32.  Statically loop over groups."""
    for g in range(num_groups):
        lo = g * group_size
        hi = lo + group_size

        xg = x_ref[:, lo:hi].astype(jnp.float32)       # (TR, G)
        bfg = bf_ref[:, g:g + 1].astype(jnp.float32)   # (TR, 1)

        # per-group amax / amin over the lane axis
        xmax = jnp.max(xg, axis=-1, keepdims=True)
        xmin = jnp.min(xg, axis=-1, keepdims=True)
        abs_max = jnp.maximum(jnp.abs(xmax), jnp.abs(xmin))

        # learned bound: sigmoid(bound_factor) * abs_max
        abs_max = jax.nn.sigmoid(bfg) * abs_max

        # shared exponent: ceil(log2(abs_max) - (e_bits - 1)), clamped to scale range
        shared_exp = jnp.ceil(jnp.log2(abs_max) - (e_bits - 1))
        shared_exp = jnp.clip(shared_exp, float(smin), float(smax))

        # fake quant / dequant (round-half-to-even matches torch.round)
        x_int = jnp.round(xg * jnp.exp2(-shared_exp))
        x_int = jnp.clip(x_int, float(emin), float(emax))
        x_dq = x_int * jnp.exp2(shared_exp)

        o_ref[:, lo:hi] = x_dq.astype(o_ref.dtype)


def uniform_quantizer_weight_fwd(x, bound_factor, *, group_size, s_bits=8, e_bits=8,
                                 target_block_bytes=4 * 1024 * 1024,
                                 vmem_limit_bytes=48 * 1024 * 1024):
    """Pallas implementation of UniformQuantizer.fake_quant for quant_weight=True,
    disable_zero_point=True, group_size != None.

    x:            (out_features, in_features), any float dtype (kept as I/O dtype).
    bound_factor: (out_features, in_features // group_size, 1).
    """
    assert 2 <= s_bits <= 8 and 2 <= e_bits <= 8
    emax = 2 ** (e_bits - 1) - 1
    emin = -(2 ** (e_bits - 1))
    smax = 2 ** (s_bits - 1) - 1
    smin = -(2 ** (s_bits - 1))

    out_feat, in_feat = x.shape
    assert in_feat % group_size == 0, "in_features must be divisible by group_size"
    num_groups = in_feat // group_size

    bf2 = bound_factor.reshape(out_feat, num_groups).astype(jnp.float32)

    # ---- row-tile selection: biggest block ~target_block_bytes, multiple of 8 rows ----
    itemsize = jnp.dtype(x.dtype).itemsize
    bytes_per_row = max(1, in_feat * itemsize)
    tr = target_block_bytes // bytes_per_row
    tr = int(max(8, min(1024, (tr // 8) * 8)))
    rows_min = ((out_feat + 7) // 8) * 8          # smallest legal padded row count
    tr = min(tr, rows_min)
    rows_padded = ((out_feat + tr - 1) // tr) * tr

    if rows_padded != out_feat:
        pad = rows_padded - out_feat
        x_in = jnp.pad(x, ((0, pad), (0, 0)))
        bf_in = jnp.pad(bf2, ((0, pad), (0, 0)))
    else:
        x_in = x
        bf_in = bf2

    grid = (rows_padded // tr,)

    kernel = functools.partial(
        _fake_quant_kernel, group_size=group_size, num_groups=num_groups,
        e_bits=e_bits, emin=emin, emax=emax, smin=smin, smax=smax,
    )

    # Purely memory-bound: ~1 read + 1 write of the weight, tiny EUP work per group.
    cost = pl.CostEstimate(
        flops=6 * rows_padded * in_feat,
        transcendentals=3 * rows_padded * num_groups,
        bytes_accessed=2 * rows_padded * in_feat * itemsize
        + rows_padded * num_groups * 4,
    )

    out = pl.pallas_call(
        kernel,
        out_shape=jax.ShapeDtypeStruct((rows_padded, in_feat), x.dtype),
        grid_spec=pltpu.PrefetchScalarGridSpec(
            num_scalar_prefetch=0,
            grid=grid,
            in_specs=[
                pl.BlockSpec((tr, in_feat), lambda i: (i, 0)),
                pl.BlockSpec((tr, num_groups), lambda i: (i, 0)),
            ],
            out_specs=pl.BlockSpec((tr, in_feat), lambda i: (i, 0)),
        ),
        compiler_params=pltpu.CompilerParams(
            dimension_semantics=("parallel",),
            vmem_limit_bytes=vmem_limit_bytes,
        ),
        cost_estimate=cost,
    )(x_in, bf_in)

    if rows_padded != out_feat:
        out = out[:out_feat]
    return out


def _reference_fwd(x, bound_factor, *, group_size, s_bits=8, e_bits=8):
    """Pure-JAX reference mirroring the PyTorch fake_quant (f32 math)."""
    emax = 2 ** (e_bits - 1) - 1
    emin = -(2 ** (e_bits - 1))
    smax = 2 ** (s_bits - 1) - 1
    smin = -(2 ** (s_bits - 1))
    ori_shape = x.shape
    xg = x.astype(jnp.float32).reshape(*ori_shape[:-1], -1, group_size)
    xmax = jnp.max(xg, axis=-1, keepdims=True)
    xmin = jnp.min(xg, axis=-1, keepdims=True)
    abs_max = jnp.maximum(jnp.abs(xmax), jnp.abs(xmin))
    abs_max = jax.nn.sigmoid(bound_factor.astype(jnp.float32)) * abs_max
    shared_exp = jnp.ceil(jnp.log2(abs_max) - (e_bits - 1))
    shared_exp = jnp.clip(shared_exp, smin, smax)
    x_int = jnp.round(xg * jnp.exp2(-shared_exp))
    x_int = jnp.clip(x_int, emin, emax)
    return (x_int * jnp.exp2(shared_exp)).reshape(ori_shape)


if __name__ == "__main__":
    key = jax.random.PRNGKey(0)
    k1, k2, k3 = jax.random.split(key, 3)
    ok = True

    # --- test 1: small f32 weight, group_size < 128 ---
    out_features, in_features, group_size = 8, 64, 32
    num_groups = in_features // group_size
    w = jax.random.normal(k1, (out_features, in_features), dtype=jnp.float32)
    bf = jnp.ones((out_features, num_groups, 1), dtype=jnp.float32) * 4.0  # init: ones*4
    out = jax.block_until_ready(
        uniform_quantizer_weight_fwd(w, bf, group_size=group_size, s_bits=8, e_bits=8))
    ref = _reference_fwd(w, bf, group_size=group_size, s_bits=8, e_bits=8)
    ok &= out.shape == w.shape and out.dtype == w.dtype
    ok &= bool(jnp.allclose(out, ref, atol=1e-5, rtol=1e-5))

    # --- test 2: out_features not a multiple of 8 (exercises row padding), G = 128 ---
    out_features, in_features, group_size = 12, 256, 128
    num_groups = in_features // group_size
    w = jax.random.normal(k2, (out_features, in_features), dtype=jnp.float32)
    bf = jnp.ones((out_features, num_groups, 1), dtype=jnp.float32) * 4.0
    out = jax.block_until_ready(
        uniform_quantizer_weight_fwd(w, bf, group_size=group_size, s_bits=8, e_bits=8))
    ref = _reference_fwd(w, bf, group_size=group_size, s_bits=8, e_bits=8)
    ok &= out.shape == w.shape and out.dtype == w.dtype
    ok &= bool(jnp.allclose(out, ref, atol=1e-5, rtol=1e-5))

    # --- test 3: bf16 native-dtype I/O (f32 math inside kernel) ---
    out_features, in_features, group_size = 16, 256, 64
    num_groups = in_features // group_size
    w = jax.random.normal(k3, (out_features, in_features), dtype=jnp.bfloat16)
    bf = jnp.ones((out_features, num_groups, 1), dtype=jnp.float32) * 4.0
    out = jax.block_until_ready(
        uniform_quantizer_weight_fwd(w, bf, group_size=group_size, s_bits=8, e_bits=8))
    ref = _reference_fwd(w, bf, group_size=group_size, s_bits=8, e_bits=8)
    ok &= out.shape == w.shape and out.dtype == w.dtype
    ok &= bool(jnp.allclose(out.astype(jnp.float32), ref, atol=1e-2, rtol=1e-2))

    assert ok, "mismatch vs reference"
    print("KERNEL_OK")
</pallas_src>

<mosaic_0001>
module attributes {stable_mosaic.version = 11 : i64} {
  func.func @_fake_quant_kernel(%arg0: i32, %arg1: memref<8x64xf32, #tpu.memory_space<vmem>>, %arg2: memref<8x2xf32, #tpu.memory_space<vmem>>, %arg3: memref<8x64xf32, #tpu.memory_space<vmem>>) attributes {dimension_semantics = [#tpu.dimension_semantics<parallel>], iteration_bounds = array<i64: 1>, scalar_prefetch = 0 : i64, scratch_operands = 0 : i64, tpu.core_type = #tpu.core_type<tc>, window_params = [{transform_indices = @transform_0, window_bounds = array<i64: 8, 64>}, {transform_indices = @transform_1, window_bounds = array<i64: 8, 2>}, {transform_indices = @transform_2, window_bounds = array<i64: 8, 64>}]} {
    %c0 = arith.constant 0 : index
    %c0_0 = arith.constant 0 : index
    %0 = vector.load %arg1[%c0, %c0_0] : memref<8x64xf32, #tpu.memory_space<vmem>>, vector<8x32xf32>
    %c0_1 = arith.constant 0 : index
    %c0_2 = arith.constant 0 : index
    %1 = vector.load %arg2[%c0_1, %c0_2] : memref<8x2xf32, #tpu.memory_space<vmem>>, vector<8x1xf32>
    %cst = arith.constant dense<0xFF800000> : vector<8xf32>
    %2 = vector.multi_reduction <maximumf>, %0, %cst [1] : vector<8x32xf32> to vector<8xf32>
    %3 = vector.shape_cast %2 : vector<8xf32> to vector<8x1xf32>
    %cst_3 = arith.constant dense<0x7F800000> : vector<8xf32>
    %4 = vector.multi_reduction <minimumf>, %0, %cst_3 [1] : vector<8x32xf32> to vector<8xf32>
    %5 = vector.shape_cast %4 : vector<8xf32> to vector<8x1xf32>
    %6 = math.absf %3 : vector<8x1xf32>
    %7 = math.absf %5 : vector<8x1xf32>
    %8 = arith.maximumf %6, %7 : vector<8x1xf32>
    %9 = arith.negf %1 : vector<8x1xf32>
    %10 = math.exp %9 : vector<8x1xf32>
    %cst_4 = arith.constant 1.000000e+00 : f32
    %11 = vector.broadcast %cst_4 : f32 to vector<8x1xf32>
    %12 = arith.addf %11, %10 : vector<8x1xf32>
    %13 = arith.divf %11, %12 : vector<8x1xf32>
    %14 = arith.mulf %13, %8 : vector<8x1xf32>
    %15 = math.log %14 : vector<8x1xf32>
    %cst_5 = arith.constant 2.000000e+00 : f32
    %16 = math.log %cst_5 : f32
    %17 = vector.broadcast %16 : f32 to vector<8x1xf32>
    %18 = arith.divf %15, %17 : vector<8x1xf32>
    %cst_6 = arith.constant 7.000000e+00 : f32
    %19 = vector.broadcast %cst_6 : f32 to vector<8x1xf32>
    %20 = arith.subf %18, %19 : vector<8x1xf32>
    %21 = math.ceil %20 : vector<8x1xf32>
    %cst_7 = arith.constant -1.280000e+02 : f32
    %cst_8 = arith.constant 1.270000e+02 : f32
    %22 = vector.broadcast %cst_7 : f32 to vector<8x1xf32>
    %23 = arith.maximumf %22, %21 : vector<8x1xf32>
    %24 = vector.broadcast %cst_8 : f32 to vector<8x1xf32>
    %25 = arith.minimumf %24, %23 : vector<8x1xf32>
    %cst_9 = arith.constant 0.000000e+00 : f32
    %26 = vector.broadcast %cst_9 : f32 to vector<8x1xf32>
    %27 = arith.subf %26, %25 : vector<8x1xf32>
    %28 = math.exp2 %27 : vector<8x1xf32>
    %29 = vector.broadcast %28 : vector<8x1xf32> to vector<8x32xf32>
    %30 = arith.mulf %0, %29 : vector<8x32xf32>
    %31 = math.roundeven %30 : vector<8x32xf32>
    %cst_10 = arith.constant -1.280000e+02 : f32
    %cst_11 = arith.constant 1.270000e+02 : f32
    %32 = vector.broadcast %cst_10 : f32 to vector<8x32xf32>
    %33 = arith.maximumf %32, %31 : vector<8x32xf32>
    %34 = vector.broadcast %cst_11 : f32 to vector<8x32xf32>
    %35 = arith.minimumf %34, %33 : vector<8x32xf32>
    %36 = math.exp2 %25 : vector<8x1xf32>
    %37 = vector.broadcast %36 : vector<8x1xf32> to vector<8x32xf32>
    %38 = arith.mulf %35, %37 : vector<8x32xf32>
    %c0_12 = arith.constant 0 : index
    %c0_13 = arith.constant 0 : index
    %39 = vector.load %arg3[%c0_12, %c0_13] : memref<8x64xf32, #tpu.memory_space<vmem>>, vector<8x32xf32>
    tpu.vector_store %arg3[%c0_12, %c0_13], %38 {strides = array<i32>} : memref<8x64xf32, #tpu.memory_space<vmem>>, vector<8x32xf32>,
    %c0_14 = arith.constant 0 : index
    %c32 = arith.constant 32 : index
    %40 = vector.load %arg1[%c0_14, %c32] : memref<8x64xf32, #tpu.memory_space<vmem>>, vector<8x32xf32>
    %c0_15 = arith.constant 0 : index
    %c1 = arith.constant 1 : index
    %41 = vector.load %arg2[%c0_15, %c1] : memref<8x2xf32, #tpu.memory_space<vmem>>, vector<8x1xf32>
    %cst_16 = arith.constant dense<0xFF800000> : vector<8xf32>
    %42 = vector.multi_reduction <maximumf>, %40, %cst_16 [1] : vector<8x32xf32> to vector<8xf32>
    %43 = vector.shape_cast %42 : vector<8xf32> to vector<8x1xf32>
    %cst_17 = arith.constant dense<0x7F800000> : vector<8xf32>
    %44 = vector.multi_reduction <minimumf>, %40, %cst_17 [1] : vector<8x32xf32> to vector<8xf32>
    %45 = vector.shape_cast %44 : vector<8xf32> to vector<8x1xf32>
    %46 = math.absf %43 : vector<8x1xf32>
    %47 = math.absf %45 : vector<8x1xf32>
    %48 = arith.maximumf %46, %47 : vector<8x1xf32>
    %49 = arith.negf %41 : vector<8x1xf32>
    %50 = math.exp %49 : vector<8x1xf32>
    %cst_18 = arith.constant 1.000000e+00 : f32
    %51 = vector.broadcast %cst_18 : f32 to vector<8x1xf32>
    %52 = arith.addf %51, %50 : vector<8x1xf32>
    %53 = arith.divf %51, %52 : vector<8x1xf32>
    %54 = arith.mulf %53, %48 : vector<8x1xf32>
    %55 = math.log %54 : vector<8x1xf32>
    %cst_19 = arith.constant 2.000000e+00 : f32
    %56 = math.log %cst_19 : f32
    %57 = vector.broadcast %56 : f32 to vector<8x1xf32>
    %58 = arith.divf %55, %57 : vector<8x1xf32>
    %cst_20 = arith.constant 7.000000e+00 : f32
    %59 = vector.broadcast %cst_20 : f32 to vector<8x1xf32>
    %60 = arith.subf %58, %59 : vector<8x1xf32>
    %61 = math.ceil %60 : vector<8x1xf32>
    %cst_21 = arith.constant -1.280000e+02 : f32
    %cst_22 = arith.constant 1.270000e+02 : f32
    %62 = vector.broadcast %cst_21 : f32 to vector<8x1xf32>
    %63 = arith.maximumf %62, %61 : vector<8x1xf32>
    %64 = vector.broadcast %cst_22 : f32 to vector<8x1xf32>
    %65 = arith.minimumf %64, %63 : vector<8x1xf32>
    %cst_23 = arith.constant 0.000000e+00 : f32
    %66 = vector.broadcast %cst_23 : f32 to vector<8x1xf32>
    %67 = arith.subf %66, %65 : vector<8x1xf32>
    %68 = math.exp2 %67 : vector<8x1xf32>
    %69 = vector.broadcast %68 : vector<8x1xf32> to vector<8x32xf32>
    %70 = arith.mulf %40, %69 : vector<8x32xf32>
    %71 = math.roundeven %70 : vector<8x32xf32>
    %cst_24 = arith.constant -1.280000e+02 : f32
    %cst_25 = arith.constant 1.270000e+02 : f32
    %72 = vector.broadcast %cst_24 : f32 to vector<8x32xf32>
    %73 = arith.maximumf %72, %71 : vector<8x32xf32>
    %74 = vector.broadcast %cst_25 : f32 to vector<8x32xf32>
    %75 = arith.minimumf %74, %73 : vector<8x32xf32>
    %76 = math.exp2 %65 : vector<8x1xf32>
    %77 = vector.broadcast %76 : vector<8x1xf32> to vector<8x32xf32>
    %78 = arith.mulf %75, %77 : vector<8x32xf32>
    %c0_26 = arith.constant 0 : index
    %c32_27 = arith.constant 32 : index
    %79 = vector.load %arg3[%c0_26, %c32_27] : memref<8x64xf32, #tpu.memory_space<vmem>>, vector<8x32xf32>
    tpu.vector_store %arg3[%c0_26, %c32_27], %78 {strides = array<i32>} : memref<8x64xf32, #tpu.memory_space<vmem>>, vector<8x32xf32>,
    return
  }
  func.func @transform_0(%arg0: i32) -> (i32, i32) {
    %c0_i32 = arith.constant 0 : i32
    %c0_i32_0 = arith.constant 0 : i32
    return %arg0, %c0_i32 : i32, i32
  }
  func.func @transform_1(%arg0: i32) -> (i32, i32) {
    %c0_i32 = arith.constant 0 : i32
    %c0_i32_0 = arith.constant 0 : i32
    return %arg0, %c0_i32 : i32, i32
  }
  func.func @transform_2(%arg0: i32) -> (i32, i32) {
    %c0_i32 = arith.constant 0 : i32
    %c0_i32_0 = arith.constant 0 : i32
    return %arg0, %c0_i32 : i32, i32
  }
}

</mosaic_0001>

<llo_original>
// kernel: tpu_custom_call.1
$region0: #{tpu_custom_call.1}
  #allocation0 [shape = 'u32[]', space=smem, size = 0x4, offset = 0x4, fixed_abs, tag = 'smem constant byte address 0x4 - core index']
  #allocation1 [shape = 'u32[144,128]{1,0:T(1,128)}', space=vmem, size = 0x12000, scoped, tag = 'internal scratch']
  %s0 = inlined_call_operand.vmem [shape: f32[8,64], index: 0, kind: input, shape index: {}]
  %s1 = inlined_call_operand.vmem [shape: f32[8,2], index: 1, kind: input, shape index: {}]
  %s2 = inlined_call_operand.hbm [shape: f32[8,64], index: 2, kind: output, shape index: {}]
  %s3 = sld [smem:[#allocation0]]
  $region18: #{tpu_custom_call.1} parent=0
    _
  %s5 = ssub.s32 1, %s3
  %s6 = scalar_select 0, %s5, %s3
  $region1: #{tpu_custom_call.1} parent=0
    #allocation2 [shape = 'u8[4096]{0}', space=vmem, size = 0x1000, scoped, tag = 'output window, operand 0, single buffered']
    #allocation3 [shape = 's32[1]{0}', space=sflag, size = 0x4, scoped, tag = 'scoped memory for tpu_custom_call.1']
    %7 = vsyncpa [#allocation3], 0
    // Predicated region
    $region2: #{tpu_custom_call.1} parent=1 // pred_check
      _
    $region3: #{tpu_custom_call.1} parent=1 // pred_check_branch
      %9 = sbr.rel (0) target = $region5
    $region4: #{tpu_custom_call.1} parent=1 // pred_region
      _
    $region5: #{tpu_custom_call.1} parent=1 // pred_fallthru
      _
    // Predicated region
    $region6: #{tpu_custom_call.1} parent=1 // pred_check
      _
    $region7: #{tpu_custom_call.1} parent=1 // pred_check_branch
      %11 = sbr.rel (0) target = $region9
    $region8: #{tpu_custom_call.1} parent=1 // pred_region
      _
    $region9: #{tpu_custom_call.1} parent=1 // pred_fallthru
      _
    %v12 = vld [vmem:[%s0] sm:$0xff]
    %v13 = vld [vmem:[%s1] sm:$0xff]
    %vm14 = vcmask 261120
    %v15 = vsel %vm14, %v12, -inf
    %16 = vmax.xlane.f32.xlu0 %v15
    %v17 = vpop.xlane.xlu0 %16
    %v18 = vsel %vm14, %v12, inf
    %19 = vmin.xlane.f32.xlu0 %v18
    %v20 = vpop.xlane.xlu0 %19
    %v21 = vand.u32 2147483647, %v17
    %v22 = vand.u32 2147483647, %v20
    %v23 = vmax.f32 %v21, %v22
    %v24 = vxor.u32 %v13, 2147483648
    %v25 = vmul.f32 %v24, 1.442695
    %v26 = vpow.pop %v25
    %v27 = vadd.f32 %v26, 1.0
    %v28 = vrcp.pop %v27
    %v29 = vmul.f32 1.0, %v28
    %v30 = vmul.f32 %v29, %v23
    %v31 = vlog2.pop %v30
    %v32 = vmul.f32 %v31, 0.6931472
    %v33 = vrcp.pop 0.6931472
    %v34 = vmul.f32 %v32, %v33
    %v35 = vsub.f32 %v34, 7.0
    %v36 = vceil.f32 %v35
    %v37 = vmax.f32 %v36, -128.0
    %v38 = vmin.f32 %v37, 127.0
    %v39 = vsub.f32 0.0, %v38
    %v40 = vpow.pop %v39
    %42 = vset.pattern.permute.xlu0 0
    %43 = vperm.xlu0 %42, %v40
    %v44 = vpop.permute.xlu0 %43
    %v46 = vmul.f32 %v12, %v44
    %v47 = vround.ne.pseudo %v46
    %v48 = vmax.f32 %v47, -128.0
    %v49 = vmin.f32 %v48, 127.0
    %v50 = vpow.pop %v38
    %52 = vset.pattern.permute.xlu0 0
    %53 = vperm.xlu0 %52, %v50
    %v54 = vpop.permute.xlu0 %53
    %v56 = vmul.f32 %v49, %v54
    %57 = vst.msk [vmem:[#allocation2] sm:$0xff] %vm14, %v56
    %v58 = vld [vmem:[%s0] sm:$0xff]
    %v59 = vld [vmem:[%s1] sm:$0xff]
    %vm60 = vcmask 523520
    %v61 = vsel %vm60, %v58, -inf
    %62 = vmax.xlane.f32.xlu0 %v61
    %v63 = vpop.xlane.xlu0 %62
    %v64 = vsel %vm60, %v58, inf
    %65 = vmin.xlane.f32.xlu0 %v64
    %v66 = vpop.xlane.xlu0 %65
    %v67 = vand.u32 2147483647, %v63
    %v68 = vand.u32 2147483647, %v66
    %v69 = vmax.f32 %v67, %v68
    %v70 = vxor.u32 %v59, 2147483648
    %v71 = vmul.f32 %v70, 1.442695
    %v72 = vpow.pop %v71
    %v73 = vadd.f32 %v72, 1.0
    %v74 = vrcp.pop %v73
    %v75 = vmul.f32 1.0, %v74
    %v76 = vmul.f32 %v75, %v69
    %v77 = vlog2.pop %v76
    %v78 = vmul.f32 %v77, 0.6931472
    %v79 = vmul.f32 %v78, %v33
    %v80 = vsub.f32 %v79, 7.0
    %v81 = vceil.f32 %v80
    %v82 = vmax.f32 %v81, -128.0
    %v83 = vmin.f32 %v82, 127.0
    %v84 = vsub.f32 0.0, %v83
    %v85 = vpow.pop %v84
    %87 = vset.pattern.permute.xlu0 1
    %88 = vperm.xlu0 %87, %v85
    %v89 = vpop.permute.xlu0 %88
    %v91 = vmul.f32 %v58, %v89
    %v92 = vround.ne.pseudo %v91
    %v93 = vmax.f32 %v92, -128.0
    %v94 = vmin.f32 %v93, 127.0
    %v95 = vpow.pop %v83
    %97 = vset.pattern.permute.xlu0 1
    %98 = vperm.xlu0 %97, %v95
    %v99 = vpop.permute.xlu0 %98
    %v101 = vmul.f32 %v94, %v99
    %102 = vst.msk [vmem:[#allocation2] sm:$0xff] %vm60, %v101
    // Predicated region
    $region10: #{tpu_custom_call.1} parent=1 // pred_check
      _
    $region11: #{tpu_custom_call.1} parent=1 // pred_check_branch
      %104 = sbr.rel (0) target = $region13
    $region12: #{tpu_custom_call.1} parent=1 // pred_region
      %s106 = ssub.s32 128, 128
      %107 = vsyncadd [#allocation3], %s106
      %s109 = sshll.u32 [#allocation2], 4
      %s110 = int_to_ptr.vmem [resolvable:$true] %s109
      %112 = dma.vmem_to_hbm [thread:$0]  %s110, 128, %s2, [#allocation3]
    $region13: #{tpu_custom_call.1} parent=1 // pred_fallthru
      _
    // Predicated region
    $region14: #{tpu_custom_call.1} parent=1 // pred_check
      _
    $region15: #{tpu_custom_call.1} parent=1 // pred_check_branch
      %114 = sbr.rel (0) target = $region17
    $region16: #{tpu_custom_call.1} parent=1 // pred_region
      %115 = dma.done [#allocation3], 128
    $region17: #{tpu_custom_call.1} parent=1 // pred_fallthru
      _
    %116 = vsyncpa [#allocation3], 1

</llo_original>
